<compile_context>
chip_gen: v5e
topology: v5e:2x2
jax: 0.10.0
libtpu: 0.0.40
codegen_flags: <defaults>
</compile_context>

<pallas_src>
import functools

import jax
import jax.numpy as jnp
from jax.experimental import pallas as pl
from jax.experimental.pallas import tpu as pltpu

GP = 32          # per-gate lane sub-block (H <= 32); 4 * GP = 128 = one lane tile
GL = 4 * GP      # packed gate lane width (one 128-lane block for all four gates)
OP = 128         # lane-padded output width (lane-dense final store)


def lstm_kernel(gx_ref, w_hh_ref, h0_ref, c0_ref, w_lin_ref, b_lin_ref,
                pred_ref, h_scr, c_scr, *, chunk, batch, unroll):
    """One time-chunk of the LSTM recurrence; h/c carried in VMEM scratch."""
    step_i = pl.program_id(0)

    @pl.when(step_i == 0)
    def _init():
        h_scr[...] = h0_ref[...]
        c_scr[...] = c0_ref[...]

    # Loop-invariant recurrent weights: (GP, 4*GP) = (32, 128) f32 (~4 vregs).
    w_hh = w_hh_ref[...]

    def step(t, carry):
        h, c = carry                                             # (B, GP) each
        row = pl.multiple_of(t * batch, batch)
        g_x = gx_ref[pl.ds(row, batch), :]                       # (B, 4*GP)
        gates = g_x + jnp.dot(h, w_hh, preferred_element_type=jnp.float32)
        # Each gate lives in its own 32-lane sub-block of the single lane tile.
        i_g = jax.nn.sigmoid(gates[:, 0 * GP:1 * GP])
        f_g = jax.nn.sigmoid(gates[:, 1 * GP:2 * GP])
        g_g = jnp.tanh(gates[:, 2 * GP:3 * GP])
        o_g = jax.nn.sigmoid(gates[:, 3 * GP:4 * GP])
        c_new = f_g * c + i_g * g_g
        h_new = o_g * jnp.tanh(c_new)
        return h_new, c_new

    h, c = jax.lax.fori_loop(0, chunk, step, (h_scr[...], c_scr[...]),
                             unroll=unroll)
    h_scr[...] = h
    c_scr[...] = c

    @pl.when(step_i == pl.num_programs(0) - 1)
    def _finalize():
        # Final projection of the last hidden state (lane-dense padded store).
        pred_ref[...] = (
            jnp.dot(h, w_lin_ref[...], preferred_element_type=jnp.float32)
            + b_lin_ref[...]
        )


def _pack_gate_weights(w, H):
    """(4H, D) PyTorch gate-stacked weights -> (D, 4*GP) transposed, per-gate packed."""
    D = w.shape[1]
    out = jnp.zeros((D, GL), dtype=jnp.float32)
    for g in range(4):
        out = out.at[:, g * GP:g * GP + H].set(
            w[g * H:(g + 1) * H, :].T.astype(jnp.float32))
    return out


def _pack_gate_bias(b, H):
    out = jnp.zeros((GL,), dtype=jnp.float32)
    for g in range(4):
        out = out.at[g * GP:g * GP + H].set(b[g * H:(g + 1) * H].astype(jnp.float32))
    return out


def _auto_chunk(T, cap=64):
    divs = [d for d in range(1, min(T, cap) + 1) if T % d == 0]
    by8 = [d for d in divs if d % 8 == 0]
    return max(by8) if by8 else max(divs)


def _pick_unroll(chunk):
    for u in (8, 4, 2):
        if chunk % u == 0:
            return u
    return 1


@functools.partial(jax.jit, static_argnames=("time_chunk",))
def lstm_forward(x_btI, w_ih, w_hh, b_ih, b_hh, h0, c0, w_lin, b_lin, *,
                 time_chunk=None):
    """x_btI: (B, T, I) batch_first input, as in the PyTorch module (type=1)."""
    B, T, I = x_btI.shape
    H = h0.shape[-1]
    O = w_lin.shape[0]
    # TODO(synk): H > 32 would need per-gate sub-blocks wider than 32 lanes.
    assert 4 * GP == GL and H <= GP

    chunk = time_chunk if time_chunk is not None else _auto_chunk(T)
    assert T % chunk == 0, (T, chunk)
    num_chunks = T // chunk
    unroll = _pick_unroll(chunk)

    # ---- Hoisted input projection (plain XLA; parallel across T*B rows). ----
    # Time-major flatten so timestep t of the current chunk is rows [t*B,(t+1)*B).
    x_flat = jnp.transpose(x_btI, (1, 0, 2)).reshape(T * B, I).astype(jnp.float32)
    w_ih_p = _pack_gate_weights(w_ih, H)                          # (I, 128)
    b_p = _pack_gate_bias(b_ih + b_hh, H)                         # (128,)
    gx = x_flat @ w_ih_p + b_p                                    # (T*B, 128)

    # ---- Packed / padded recurrent & output parameters. ----
    w_hh_p = jnp.zeros((GP, GL), jnp.float32).at[:H, :].set(
        _pack_gate_weights(w_hh, H))                              # (32, 128)
    h0_p = jnp.zeros((B, GP), jnp.float32).at[:, :H].set(h0.astype(jnp.float32))
    c0_p = jnp.zeros((B, GP), jnp.float32).at[:, :H].set(c0.astype(jnp.float32))
    w_lin_p = jnp.zeros((GP, OP), jnp.float32).at[:H, :O].set(
        w_lin.T.astype(jnp.float32))
    b_lin_p = jnp.zeros((1, OP), jnp.float32).at[0, :O].set(
        b_lin.astype(jnp.float32))

    kernel = functools.partial(lstm_kernel, chunk=chunk, batch=B, unroll=unroll)

    grid_spec = pltpu.PrefetchScalarGridSpec(
        num_scalar_prefetch=0,
        grid=(num_chunks,),
        in_specs=[
            pl.BlockSpec((chunk * B, GL), lambda i: (i, 0)),   # gx time-chunk stream
            pl.BlockSpec((GP, GL), lambda i: (0, 0)),          # w_hh^T (gate-packed)
            pl.BlockSpec((B, GP), lambda i: (0, 0)),           # h0
            pl.BlockSpec((B, GP), lambda i: (0, 0)),           # c0
            pl.BlockSpec((GP, OP), lambda i: (0, 0)),          # w_lin^T
            pl.BlockSpec((1, OP), lambda i: (0, 0)),           # b_lin
        ],
        out_specs=pl.BlockSpec((B, OP), lambda i: (0, 0)),
        scratch_shapes=[
            pltpu.VMEM((B, GP), jnp.float32),                  # h carry
            pltpu.VMEM((B, GP), jnp.float32),                  # c carry
        ],
    )

    pred_pad = pl.pallas_call(
        kernel,
        out_shape=jax.ShapeDtypeStruct((B, OP), jnp.float32),
        grid_spec=grid_spec,
        compiler_params=pltpu.CompilerParams(
            dimension_semantics=("arbitrary",),
            vmem_limit_bytes=32 * 1024 * 1024),
    )(gx, w_hh_p, h0_p, c0_p, w_lin_p, b_lin_p)

    return pred_pad[:, :O]


def lstm_reference(x_btI, w_ih, w_hh, b_ih, b_hh, h0, c0, w_lin, b_lin):
    """Pure-JAX reference (mirrors torch.nn.LSTM + Linear, type=1)."""
    H = h0.shape[-1]

    def step(carry, x_t):
        h, c = carry
        gates = x_t @ w_ih.T + h @ w_hh.T + b_ih + b_hh
        i = jax.nn.sigmoid(gates[:, 0 * H:1 * H])
        f = jax.nn.sigmoid(gates[:, 1 * H:2 * H])
        g = jnp.tanh(gates[:, 2 * H:3 * H])
        o = jax.nn.sigmoid(gates[:, 3 * H:4 * H])
        c_new = f * c + i * g
        h_new = o * jnp.tanh(c_new)
        return (h_new, c_new), h_new

    x_tbI = jnp.transpose(x_btI, (1, 0, 2))
    (h_last, _), _ = jax.lax.scan(step, (h0, c0), x_tbI)
    return h_last @ w_lin.T + b_lin


if __name__ == "__main__":
    # Small shapes consistent with the module (hidden=20, input=10, output=2,
    # batch=32; seq_len reduced from 1000 to 16 to stay small).
    B, T, I, H, O = 32, 16, 10, 20, 2

    key = jax.random.PRNGKey(0)
    keys = jax.random.split(key, 9)
    scale = 1.0 / jnp.sqrt(H)

    x = jax.random.normal(keys[0], (B, T, I), dtype=jnp.float32)
    # PyTorch-style uniform(-1/sqrt(H), 1/sqrt(H)) parameter init.
    w_ih = jax.random.uniform(keys[1], (4 * H, I), minval=-scale, maxval=scale)
    w_hh = jax.random.uniform(keys[2], (4 * H, H), minval=-scale, maxval=scale)
    b_ih = jax.random.uniform(keys[3], (4 * H,), minval=-scale, maxval=scale)
    b_hh = jax.random.uniform(keys[4], (4 * H,), minval=-scale, maxval=scale)
    w_lin = jax.random.uniform(keys[5], (O, H), minval=-scale, maxval=scale)
    b_lin = jax.random.uniform(keys[6], (O,), minval=-scale, maxval=scale)
    # The module draws random h0/c0 in forward(); here drawn deterministically.
    h0 = jax.random.normal(keys[7], (B, H), dtype=jnp.float32)
    c0 = jax.random.normal(keys[8], (B, H), dtype=jnp.float32)

    # time_chunk=4 -> grid of 4 steps, exercising the cross-chunk h/c carry.
    pred = lstm_forward(x, w_ih, w_hh, b_ih, b_hh, h0, c0, w_lin, b_lin,
                        time_chunk=4)
    pred = jax.block_until_ready(pred)

    ref = lstm_reference(x, w_ih, w_hh, b_ih, b_hh, h0, c0, w_lin, b_lin)
    assert pred.shape == (B, O)
    assert jnp.allclose(pred, ref, atol=2e-4, rtol=2e-4), (pred, ref)

    print("KERNEL_OK")
</pallas_src>

<mosaic_0001>
module attributes {stable_mosaic.version = 11 : i64} {
  func.func @lstm_kernel(%arg0: i32, %arg1: memref<128x128xf32, #tpu.memory_space<vmem>>, %arg2: memref<32x128xf32, #tpu.memory_space<vmem>>, %arg3: memref<32x32xf32, #tpu.memory_space<vmem>>, %arg4: memref<32x32xf32, #tpu.memory_space<vmem>>, %arg5: memref<32x128xf32, #tpu.memory_space<vmem>>, %arg6: memref<1x128xf32, #tpu.memory_space<vmem>>, %arg7: memref<32x128xf32, #tpu.memory_space<vmem>>, %arg8: memref<32x32xf32, #tpu.memory_space<vmem>>, %arg9: memref<32x32xf32, #tpu.memory_space<vmem>>) attributes {dimension_semantics = [#tpu.dimension_semantics<arbitrary>], iteration_bounds = array<i64: 4>, scalar_prefetch = 0 : i64, scratch_operands = 2 : i64, tpu.core_type = #tpu.core_type<tc>, window_params = [{transform_indices = @transform_0, window_bounds = array<i64: 128, 128>}, {pipeline_mode = #tpu.pipeline_mode<synchronous>, transform_indices = @transform_1, window_bounds = array<i64: 32, 128>}, {pipeline_mode = #tpu.pipeline_mode<synchronous>, transform_indices = @transform_2, window_bounds = array<i64: 32, 32>}, {pipeline_mode = #tpu.pipeline_mode<synchronous>, transform_indices = @transform_3, window_bounds = array<i64: 32, 32>}, {pipeline_mode = #tpu.pipeline_mode<synchronous>, transform_indices = @transform_4, window_bounds = array<i64: 32, 128>}, {pipeline_mode = #tpu.pipeline_mode<synchronous>, transform_indices = @transform_5, window_bounds = array<i64: 1, 128>}, {pipeline_mode = #tpu.pipeline_mode<synchronous>, transform_indices = @transform_6, window_bounds = array<i64: 32, 128>}]} {
    %c0_i32 = arith.constant 0 : i32
    %0 = arith.cmpi eq, %arg0, %c0_i32 : i32
    %1 = arith.extui %0 : i1 to i32
    %c0_i32_0 = arith.constant 0 : i32
    %2 = arith.cmpi ne, %1, %c0_i32_0 : i32
    scf.if %2 {
      %c0_35 = arith.constant 0 : index
      %c0_36 = arith.constant 0 : index
      %135 = vector.load %arg3[%c0_35, %c0_36] : memref<32x32xf32, #tpu.memory_space<vmem>>, vector<32x32xf32>
      %c0_37 = arith.constant 0 : index
      %c0_38 = arith.constant 0 : index
      %136 = vector.load %arg8[%c0_37, %c0_38] : memref<32x32xf32, #tpu.memory_space<vmem>>, vector<32x32xf32>
      tpu.vector_store %arg8[%c0_37, %c0_38], %135 {strides = array<i32>} : memref<32x32xf32, #tpu.memory_space<vmem>>, vector<32x32xf32>,
      %c0_39 = arith.constant 0 : index
      %c0_40 = arith.constant 0 : index
      %137 = vector.load %arg4[%c0_39, %c0_40] : memref<32x32xf32, #tpu.memory_space<vmem>>, vector<32x32xf32>
      %c0_41 = arith.constant 0 : index
      %c0_42 = arith.constant 0 : index
      %138 = vector.load %arg9[%c0_41, %c0_42] : memref<32x32xf32, #tpu.memory_space<vmem>>, vector<32x32xf32>
      tpu.vector_store %arg9[%c0_41, %c0_42], %137 {strides = array<i32>} : memref<32x32xf32, #tpu.memory_space<vmem>>, vector<32x32xf32>,
    } else {
    }
    %c0 = arith.constant 0 : index
    %c0_1 = arith.constant 0 : index
    %3 = vector.load %arg2[%c0, %c0_1] : memref<32x128xf32, #tpu.memory_space<vmem>>, vector<32x128xf32>
    %c0_2 = arith.constant 0 : index
    %c0_3 = arith.constant 0 : index
    %4 = vector.load %arg8[%c0_2, %c0_3] : memref<32x32xf32, #tpu.memory_space<vmem>>, vector<32x32xf32>
    %c0_4 = arith.constant 0 : index
    %c0_5 = arith.constant 0 : index
    %5 = vector.load %arg9[%c0_4, %c0_5] : memref<32x32xf32, #tpu.memory_space<vmem>>, vector<32x32xf32>
    %c0_i32_6 = arith.constant 0 : i32
    %c32_i32 = arith.constant 32 : i32
    %6 = arith.muli %c0_i32_6, %c32_i32 : i32
    %7 = tpu.assume_multiple %6, 32 : i32
    %8 = arith.index_cast %7 : i32 to index
    %c0_7 = arith.constant 0 : index
    %9 = vector.load %arg1[%8, %c0_7] : memref<128x128xf32, #tpu.memory_space<vmem>>, vector<32x128xf32>
    %cst = arith.constant dense<0.000000e+00> : vector<32x128xf32>
    %10 = tpu.matmul %4, %3, %cst {dimension_numbers = #tpu.dot_dimension_numbers<[1], [0], [0], [1], [0, 0, 1, 1], [], []>} : vector<32x32xf32>, vector<32x128xf32>, vector<32x128xf32> -> vector<32x128xf32>
    %11 = arith.addf %9, %10 : vector<32x128xf32>
    %12 = vector.extract_strided_slice %11 {offsets = [0, 0], sizes = [32, 32], strides = [1, 1]} : vector<32x128xf32> to vector<32x32xf32>
    %13 = arith.negf %12 : vector<32x32xf32>
    %14 = math.exp %13 : vector<32x32xf32>
    %cst_8 = arith.constant 1.000000e+00 : f32
    %15 = vector.broadcast %cst_8 : f32 to vector<32x32xf32>
    %16 = arith.addf %15, %14 : vector<32x32xf32>
    %17 = arith.divf %15, %16 : vector<32x32xf32>
    %18 = vector.extract_strided_slice %11 {offsets = [0, 32], sizes = [32, 32], strides = [1, 1]} : vector<32x128xf32> to vector<32x32xf32>
    %19 = arith.negf %18 : vector<32x32xf32>
    %20 = math.exp %19 : vector<32x32xf32>
    %cst_9 = arith.constant 1.000000e+00 : f32
    %21 = vector.broadcast %cst_9 : f32 to vector<32x32xf32>
    %22 = arith.addf %21, %20 : vector<32x32xf32>
    %23 = arith.divf %21, %22 : vector<32x32xf32>
    %24 = vector.extract_strided_slice %11 {offsets = [0, 64], sizes = [32, 32], strides = [1, 1]} : vector<32x128xf32> to vector<32x32xf32>
    %25 = math.tanh %24 : vector<32x32xf32>
    %26 = vector.extract_strided_slice %11 {offsets = [0, 96], sizes = [32, 32], strides = [1, 1]} : vector<32x128xf32> to vector<32x32xf32>
    %27 = arith.negf %26 : vector<32x32xf32>
    %28 = math.exp %27 : vector<32x32xf32>
    %cst_10 = arith.constant 1.000000e+00 : f32
    %29 = vector.broadcast %cst_10 : f32 to vector<32x32xf32>
    %30 = arith.addf %29, %28 : vector<32x32xf32>
    %31 = arith.divf %29, %30 : vector<32x32xf32>
    %32 = arith.mulf %23, %5 : vector<32x32xf32>
    %33 = arith.mulf %17, %25 : vector<32x32xf32>
    %34 = arith.addf %32, %33 : vector<32x32xf32>
    %35 = math.tanh %34 : vector<32x32xf32>
    %36 = arith.mulf %31, %35 : vector<32x32xf32>
    %c1_i32 = arith.constant 1 : i32
    %c32_i32_11 = arith.constant 32 : i32
    %37 = arith.muli %c1_i32, %c32_i32_11 : i32
    %38 = tpu.assume_multiple %37, 32 : i32
    %39 = arith.index_cast %38 : i32 to index
    %c0_12 = arith.constant 0 : index
    %40 = vector.load %arg1[%39, %c0_12] : memref<128x128xf32, #tpu.memory_space<vmem>>, vector<32x128xf32>
    %cst_13 = arith.constant dense<0.000000e+00> : vector<32x128xf32>
    %41 = tpu.matmul %36, %3, %cst_13 {dimension_numbers = #tpu.dot_dimension_numbers<[1], [0], [0], [1], [0, 0, 1, 1], [], []>} : vector<32x32xf32>, vector<32x128xf32>, vector<32x128xf32> -> vector<32x128xf32>
    %42 = arith.addf %40, %41 : vector<32x128xf32>
    %43 = vector.extract_strided_slice %42 {offsets = [0, 0], sizes = [32, 32], strides = [1, 1]} : vector<32x128xf32> to vector<32x32xf32>
    %44 = arith.negf %43 : vector<32x32xf32>
    %45 = math.exp %44 : vector<32x32xf32>
    %cst_14 = arith.constant 1.000000e+00 : f32
    %46 = vector.broadcast %cst_14 : f32 to vector<32x32xf32>
    %47 = arith.addf %46, %45 : vector<32x32xf32>
    %48 = arith.divf %46, %47 : vector<32x32xf32>
    %49 = vector.extract_strided_slice %42 {offsets = [0, 32], sizes = [32, 32], strides = [1, 1]} : vector<32x128xf32> to vector<32x32xf32>
    %50 = arith.negf %49 : vector<32x32xf32>
    %51 = math.exp %50 : vector<32x32xf32>
    %cst_15 = arith.constant 1.000000e+00 : f32
    %52 = vector.broadcast %cst_15 : f32 to vector<32x32xf32>
    %53 = arith.addf %52, %51 : vector<32x32xf32>
    %54 = arith.divf %52, %53 : vector<32x32xf32>
    %55 = vector.extract_strided_slice %42 {offsets = [0, 64], sizes = [32, 32], strides = [1, 1]} : vector<32x128xf32> to vector<32x32xf32>
    %56 = math.tanh %55 : vector<32x32xf32>
    %57 = vector.extract_strided_slice %42 {offsets = [0, 96], sizes = [32, 32], strides = [1, 1]} : vector<32x128xf32> to vector<32x32xf32>
    %58 = arith.negf %57 : vector<32x32xf32>
    %59 = math.exp %58 : vector<32x32xf32>
    %cst_16 = arith.constant 1.000000e+00 : f32
    %60 = vector.broadcast %cst_16 : f32 to vector<32x32xf32>
    %61 = arith.addf %60, %59 : vector<32x32xf32>
    %62 = arith.divf %60, %61 : vector<32x32xf32>
    %63 = arith.mulf %54, %34 : vector<32x32xf32>
    %64 = arith.mulf %48, %56 : vector<32x32xf32>
    %65 = arith.addf %63, %64 : vector<32x32xf32>
    %66 = math.tanh %65 : vector<32x32xf32>
    %67 = arith.mulf %62, %66 : vector<32x32xf32>
    %c2_i32 = arith.constant 2 : i32
    %c32_i32_17 = arith.constant 32 : i32
    %68 = arith.muli %c2_i32, %c32_i32_17 : i32
    %69 = tpu.assume_multiple %68, 32 : i32
    %70 = arith.index_cast %69 : i32 to index
    %c0_18 = arith.constant 0 : index
    %71 = vector.load %arg1[%70, %c0_18] : memref<128x128xf32, #tpu.memory_space<vmem>>, vector<32x128xf32>
    %cst_19 = arith.constant dense<0.000000e+00> : vector<32x128xf32>
    %72 = tpu.matmul %67, %3, %cst_19 {dimension_numbers = #tpu.dot_dimension_numbers<[1], [0], [0], [1], [0, 0, 1, 1], [], []>} : vector<32x32xf32>, vector<32x128xf32>, vector<32x128xf32> -> vector<32x128xf32>
    %73 = arith.addf %71, %72 : vector<32x128xf32>
    %74 = vector.extract_strided_slice %73 {offsets = [0, 0], sizes = [32, 32], strides = [1, 1]} : vector<32x128xf32> to vector<32x32xf32>
    %75 = arith.negf %74 : vector<32x32xf32>
    %76 = math.exp %75 : vector<32x32xf32>
    %cst_20 = arith.constant 1.000000e+00 : f32
    %77 = vector.broadcast %cst_20 : f32 to vector<32x32xf32>
    %78 = arith.addf %77, %76 : vector<32x32xf32>
    %79 = arith.divf %77, %78 : vector<32x32xf32>
    %80 = vector.extract_strided_slice %73 {offsets = [0, 32], sizes = [32, 32], strides = [1, 1]} : vector<32x128xf32> to vector<32x32xf32>
    %81 = arith.negf %80 : vector<32x32xf32>
    %82 = math.exp %81 : vector<32x32xf32>
    %cst_21 = arith.constant 1.000000e+00 : f32
    %83 = vector.broadcast %cst_21 : f32 to vector<32x32xf32>
    %84 = arith.addf %83, %82 : vector<32x32xf32>
    %85 = arith.divf %83, %84 : vector<32x32xf32>
    %86 = vector.extract_strided_slice %73 {offsets = [0, 64], sizes = [32, 32], strides = [1, 1]} : vector<32x128xf32> to vector<32x32xf32>
    %87 = math.tanh %86 : vector<32x32xf32>
    %88 = vector.extract_strided_slice %73 {offsets = [0, 96], sizes = [32, 32], strides = [1, 1]} : vector<32x128xf32> to vector<32x32xf32>
    %89 = arith.negf %88 : vector<32x32xf32>
    %90 = math.exp %89 : vector<32x32xf32>
    %cst_22 = arith.constant 1.000000e+00 : f32
    %91 = vector.broadcast %cst_22 : f32 to vector<32x32xf32>
    %92 = arith.addf %91, %90 : vector<32x32xf32>
    %93 = arith.divf %91, %92 : vector<32x32xf32>
    %94 = arith.mulf %85, %65 : vector<32x32xf32>
    %95 = arith.mulf %79, %87 : vector<32x32xf32>
    %96 = arith.addf %94, %95 : vector<32x32xf32>
    %97 = math.tanh %96 : vector<32x32xf32>
    %98 = arith.mulf %93, %97 : vector<32x32xf32>
    %c3_i32 = arith.constant 3 : i32
    %c32_i32_23 = arith.constant 32 : i32
    %99 = arith.muli %c3_i32, %c32_i32_23 : i32
    %100 = tpu.assume_multiple %99, 32 : i32
    %101 = arith.index_cast %100 : i32 to index
    %c0_24 = arith.constant 0 : index
    %102 = vector.load %arg1[%101, %c0_24] : memref<128x128xf32, #tpu.memory_space<vmem>>, vector<32x128xf32>
    %cst_25 = arith.constant dense<0.000000e+00> : vector<32x128xf32>
    %103 = tpu.matmul %98, %3, %cst_25 {dimension_numbers = #tpu.dot_dimension_numbers<[1], [0], [0], [1], [0, 0, 1, 1], [], []>} : vector<32x32xf32>, vector<32x128xf32>, vector<32x128xf32> -> vector<32x128xf32>
    %104 = arith.addf %102, %103 : vector<32x128xf32>
    %105 = vector.extract_strided_slice %104 {offsets = [0, 0], sizes = [32, 32], strides = [1, 1]} : vector<32x128xf32> to vector<32x32xf32>
    %106 = arith.negf %105 : vector<32x32xf32>
    %107 = math.exp %106 : vector<32x32xf32>
    %cst_26 = arith.constant 1.000000e+00 : f32
    %108 = vector.broadcast %cst_26 : f32 to vector<32x32xf32>
    %109 = arith.addf %108, %107 : vector<32x32xf32>
    %110 = arith.divf %108, %109 : vector<32x32xf32>
    %111 = vector.extract_strided_slice %104 {offsets = [0, 32], sizes = [32, 32], strides = [1, 1]} : vector<32x128xf32> to vector<32x32xf32>
    %112 = arith.negf %111 : vector<32x32xf32>
    %113 = math.exp %112 : vector<32x32xf32>
    %cst_27 = arith.constant 1.000000e+00 : f32
    %114 = vector.broadcast %cst_27 : f32 to vector<32x32xf32>
    %115 = arith.addf %114, %113 : vector<32x32xf32>
    %116 = arith.divf %114, %115 : vector<32x32xf32>
    %117 = vector.extract_strided_slice %104 {offsets = [0, 64], sizes = [32, 32], strides = [1, 1]} : vector<32x128xf32> to vector<32x32xf32>
    %118 = math.tanh %117 : vector<32x32xf32>
    %119 = vector.extract_strided_slice %104 {offsets = [0, 96], sizes = [32, 32], strides = [1, 1]} : vector<32x128xf32> to vector<32x32xf32>
    %120 = arith.negf %119 : vector<32x32xf32>
    %121 = math.exp %120 : vector<32x32xf32>
    %cst_28 = arith.constant 1.000000e+00 : f32
    %122 = vector.broadcast %cst_28 : f32 to vector<32x32xf32>
    %123 = arith.addf %122, %121 : vector<32x32xf32>
    %124 = arith.divf %122, %123 : vector<32x32xf32>
    %125 = arith.mulf %116, %96 : vector<32x32xf32>
    %126 = arith.mulf %110, %118 : vector<32x32xf32>
    %127 = arith.addf %125, %126 : vector<32x32xf32>
    %128 = math.tanh %127 : vector<32x32xf32>
    %129 = arith.mulf %124, %128 : vector<32x32xf32>
    %c4_i32 = arith.constant 4 : i32
    %c0_29 = arith.constant 0 : index
    %c0_30 = arith.constant 0 : index
    %130 = vector.load %arg8[%c0_29, %c0_30] : memref<32x32xf32, #tpu.memory_space<vmem>>, vector<32x32xf32>
    tpu.vector_store %arg8[%c0_29, %c0_30], %129 {strides = array<i32>} : memref<32x32xf32, #tpu.memory_space<vmem>>, vector<32x32xf32>,
    %c0_31 = arith.constant 0 : index
    %c0_32 = arith.constant 0 : index
    %131 = vector.load %arg9[%c0_31, %c0_32] : memref<32x32xf32, #tpu.memory_space<vmem>>, vector<32x32xf32>
    tpu.vector_store %arg9[%c0_31, %c0_32], %127 {strides = array<i32>} : memref<32x32xf32, #tpu.memory_space<vmem>>, vector<32x32xf32>,
    %c3_i32_33 = arith.constant 3 : i32
    %132 = arith.cmpi eq, %arg0, %c3_i32_33 : i32
    %133 = arith.extui %132 : i1 to i32
    %c0_i32_34 = arith.constant 0 : i32
    %134 = arith.cmpi ne, %133, %c0_i32_34 : i32
    scf.if %134 {
      %c0_35 = arith.constant 0 : index
      %c0_36 = arith.constant 0 : index
      %135 = vector.load %arg5[%c0_35, %c0_36] : memref<32x128xf32, #tpu.memory_space<vmem>>, vector<32x128xf32>
      %cst_37 = arith.constant dense<0.000000e+00> : vector<32x128xf32>
      %136 = tpu.matmul %129, %135, %cst_37 {dimension_numbers = #tpu.dot_dimension_numbers<[1], [0], [0], [1], [0, 0, 1, 1], [], []>} : vector<32x32xf32>, vector<32x128xf32>, vector<32x128xf32> -> vector<32x128xf32>
      %c0_38 = arith.constant 0 : index
      %c0_39 = arith.constant 0 : index
      %137 = vector.load %arg6[%c0_38, %c0_39] : memref<1x128xf32, #tpu.memory_space<vmem>>, vector<1x128xf32>
      %138 = vector.broadcast %137 : vector<1x128xf32> to vector<32x128xf32>
      %139 = arith.addf %136, %138 : vector<32x128xf32>
      %c0_40 = arith.constant 0 : index
      %c0_41 = arith.constant 0 : index
      %140 = vector.load %arg7[%c0_40, %c0_41] : memref<32x128xf32, #tpu.memory_space<vmem>>, vector<32x128xf32>
      tpu.vector_store %arg7[%c0_40, %c0_41], %139 {strides = array<i32>} : memref<32x128xf32, #tpu.memory_space<vmem>>, vector<32x128xf32>,
    } else {
    }
    return
  }
  func.func @transform_0(%arg0: i32) -> (i32, i32) {
    %c0_i32 = arith.constant 0 : i32
    %c0_i32_0 = arith.constant 0 : i32
    return %arg0, %c0_i32 : i32, i32
  }
  func.func @transform_1(%arg0: i32) -> (i32, i32) {
    %c0_i32 = arith.constant 0 : i32
    %c0_i32_0 = arith.constant 0 : i32
    %c0_i32_1 = arith.constant 0 : i32
    return %c0_i32, %c0_i32_0 : i32, i32
  }
  func.func @transform_2(%arg0: i32) -> (i32, i32) {
    %c0_i32 = arith.constant 0 : i32
    %c0_i32_0 = arith.constant 0 : i32
    %c0_i32_1 = arith.constant 0 : i32
    return %c0_i32, %c0_i32_0 : i32, i32
  }
  func.func @transform_3(%arg0: i32) -> (i32, i32) {
    %c0_i32 = arith.constant 0 : i32
    %c0_i32_0 = arith.constant 0 : i32
    %c0_i32_1 = arith.constant 0 : i32
    return %c0_i32, %c0_i32_0 : i32, i32
  }
  func.func @transform_4(%arg0: i32) -> (i32, i32) {
    %c0_i32 = arith.constant 0 : i32
    %c0_i32_0 = arith.constant 0 : i32
    %c0_i32_1 = arith.constant 0 : i32
    return %c0_i32, %c0_i32_0 : i32, i32
  }
  func.func @transform_5(%arg0: i32) -> (i32, i32) {
    %c0_i32 = arith.constant 0 : i32
    %c0_i32_0 = arith.constant 0 : i32
    %c0_i32_1 = arith.constant 0 : i32
    return %c0_i32, %c0_i32_0 : i32, i32
  }
  func.func @transform_6(%arg0: i32) -> (i32, i32) {
    %c0_i32 = arith.constant 0 : i32
    %c0_i32_0 = arith.constant 0 : i32
    %c0_i32_1 = arith.constant 0 : i32
    return %c0_i32, %c0_i32_0 : i32, i32
  }
}

</mosaic_0001>

<llo_original>
// kernel: lstm_forward.1
$region0: #{lstm_forward.1}
  #allocation0 [shape = 'u32[]', space=smem, size = 0x4, offset = 0x4, fixed_abs, tag = 'smem constant byte address 0x4 - core index']
  #allocation1 [shape = 'u32[72,128]{1,0:T(1,128)}', space=vmem, size = 0x9000, scoped, tag = 'internal scratch']
  #allocation2 [shape = 'f32[32,32]{1,0:T(8,128)}', space=vmem, size = 0x4000, scoped, tag = 'scratch operand']
  #allocation3 [shape = 'f32[32,32]{1,0:T(8,128)}', space=vmem, size = 0x4000, scoped, tag = 'scratch operand']
  %s0 = inlined_call_operand.vmem [shape: f32[512,128], index: 0, kind: input, shape index: {}]
  %s1 = inlined_call_operand.vmem [shape: f32[32,128], index: 1, kind: input, shape index: {}]
  %s2 = inlined_call_operand.vmem [shape: f32[32,32], index: 2, kind: input, shape index: {}]
  %s3 = inlined_call_operand.vmem [shape: f32[32,32], index: 3, kind: input, shape index: {}]
  %s4 = inlined_call_operand.vmem [shape: f32[32,128], index: 4, kind: input, shape index: {}]
  %s5 = inlined_call_operand.vmem [shape: f32[1,128], index: 5, kind: input, shape index: {}]
  %s6 = inlined_call_operand.vmem [shape: f32[32,128], index: 6, kind: output, shape index: {}]
  %s7 = sld [smem:[#allocation0]]
  $region65: #{lstm_forward.1} parent=0
    _
  %s9 = ssub.s32 1, %s7
  %s10 = scalar_select 0, %s9, %s7
  loop: start=0, step=1, limit=6
  $region2: #{lstm_forward.1} parent=0 // loop_pre_header
    _
  $region3: #{lstm_forward.1} parent=0 // loop_header
    %s12 = sphi 0, %s16
    %p13 = scmp.ge.s32.totalorder %s12, 6
    %s22 = sphi 0, %s24
    %s25 = sphi 0, %s22
    %s26 = sphi 0, %s25
    %s42 = sphi 0, %s26
    %s46 = sphi 0, %s46
    %s48 = sphi 0, %s46
    %s49 = sphi 0, %s48
    %s63 = sphi 0, %s49
    %s67 = sphi 0, %s67
    %s69 = sphi 0, %s67
    %s70 = sphi 0, %s69
    %s84 = sphi 0, %s70
    %s88 = sphi 0, %s88
    %s90 = sphi 0, %s88
    %s91 = sphi 0, %s90
    %s105 = sphi 0, %s91
    %s109 = sphi 0, %s109
    %s111 = sphi 0, %s109
    %s112 = sphi 0, %s111
    %s126 = sphi 0, %s112
    %s130 = sphi 0, %s130
    %s132 = sphi 0, %s130
    %s133 = sphi 0, %s132
    %s147 = sphi 0, %s133
    %s151 = sphi 0, %s151
    %s153 = sphi 0, %s151
    %s154 = sphi 0, %s153
    %s168 = sphi 0, %s154
  $region4: #{lstm_forward.1} parent=0 // loop_header_branch
    %15 = sbr.rel (%p13) target = $region8
  $region5: #{lstm_forward.1} parent=0 // loop_body
    %s17 = ssub.s32 %s12, 1
    %s18 = ssub.s32 %s12, 2
    %s19 = sadd.s32 %s12, 1
    %s20 = ssub.s32 %s12, %s19
    %p21 = scmp.eq.s32.totalorder %s20, 0
    %s23 = sadd.s32 %s22, 1
    %s24 = scalar_select %p21, %s22, %s23
    %p27 = pneg %p21
    %p28 = scmp.eq.s32.totalorder %s12, 3
    %p29 = por %p27, %p28
    %p30 = scmp.ne.s32.totalorder %s22, %s25
    %p31 = scmp.eq.s32.totalorder %s12, 0
    %p32 = por %p30, %p31
    %p33 = scmp.ne.s32.totalorder %s22, %s25
    %p34 = scmp.eq.s32.totalorder %s17, 3
    %p35 = por %p33, %p34
    %p36 = scmp.ne.s32.totalorder %s25, %s26
    %p37 = scmp.eq.s32.totalorder %s17, 0
    %p38 = por %p36, %p37
    %p39 = scmp.ne.s32.totalorder %s25, %s26
    %p40 = scmp.eq.s32.totalorder %s18, 3
    %p41 = por %p39, %p40
    %p43 = scmp.ne.s32.totalorder %s26, %s42
    %p44 = scmp.eq.s32.totalorder %s18, 0
    %p45 = por %p43, %p44
    %s47 = sadd.s32 %s46, 1
    %p50 = scmp.eq.s32.totalorder %s12, 3
    %p51 = scmp.ne.s32.totalorder %s46, %s48
    %p52 = scmp.eq.s32.totalorder %s12, 0
    %p53 = por %p51, %p52
    %p54 = scmp.ne.s32.totalorder %s46, %s48
    %p55 = scmp.eq.s32.totalorder %s17, 3
    %p56 = por %p54, %p55
    %p57 = scmp.ne.s32.totalorder %s48, %s49
    %p58 = scmp.eq.s32.totalorder %s17, 0
    %p59 = por %p57, %p58
    %p60 = scmp.ne.s32.totalorder %s48, %s49
    %p61 = scmp.eq.s32.totalorder %s18, 3
    %p62 = por %p60, %p61
    %p64 = scmp.ne.s32.totalorder %s49, %s63
    %p65 = scmp.eq.s32.totalorder %s18, 0
    %p66 = por %p64, %p65
    %s68 = sadd.s32 %s67, 1
    %p71 = scmp.eq.s32.totalorder %s12, 3
    %p72 = scmp.ne.s32.totalorder %s67, %s69
    %p73 = scmp.eq.s32.totalorder %s12, 0
    %p74 = por %p72, %p73
    %p75 = scmp.ne.s32.totalorder %s67, %s69
    %p76 = scmp.eq.s32.totalorder %s17, 3
    %p77 = por %p75, %p76
    %p78 = scmp.ne.s32.totalorder %s69, %s70
    %p79 = scmp.eq.s32.totalorder %s17, 0
    %p80 = por %p78, %p79
    %p81 = scmp.ne.s32.totalorder %s69, %s70
    %p82 = scmp.eq.s32.totalorder %s18, 3
    %p83 = por %p81, %p82
    %p85 = scmp.ne.s32.totalorder %s70, %s84
    %p86 = scmp.eq.s32.totalorder %s18, 0
    %p87 = por %p85, %p86
    %s89 = sadd.s32 %s88, 1
    %p92 = scmp.eq.s32.totalorder %s12, 3
    %p93 = scmp.ne.s32.totalorder %s88, %s90
    %p94 = scmp.eq.s32.totalorder %s12, 0
    %p95 = por %p93, %p94
    %p96 = scmp.ne.s32.totalorder %s88, %s90
    %p97 = scmp.eq.s32.totalorder %s17, 3
    %p98 = por %p96, %p97
    %p99 = scmp.ne.s32.totalorder %s90, %s91
    %p100 = scmp.eq.s32.totalorder %s17, 0
    %p101 = por %p99, %p100
    %p102 = scmp.ne.s32.totalorder %s90, %s91
    %p103 = scmp.eq.s32.totalorder %s18, 3
    %p104 = por %p102, %p103
    %p106 = scmp.ne.s32.totalorder %s91, %s105
    %p107 = scmp.eq.s32.totalorder %s18, 0
    %p108 = por %p106, %p107
    %s110 = sadd.s32 %s109, 1
    %p113 = scmp.eq.s32.totalorder %s12, 3
    %p114 = scmp.ne.s32.totalorder %s109, %s111
    %p115 = scmp.eq.s32.totalorder %s12, 0
    %p116 = por %p114, %p115
    %p117 = scmp.ne.s32.totalorder %s109, %s111
    %p118 = scmp.eq.s32.totalorder %s17, 3
    %p119 = por %p117, %p118
    %p120 = scmp.ne.s32.totalorder %s111, %s112
    %p121 = scmp.eq.s32.totalorder %s17, 0
    %p122 = por %p120, %p121
    %p123 = scmp.ne.s32.totalorder %s111, %s112
    %p124 = scmp.eq.s32.totalorder %s18, 3
    %p125 = por %p123, %p124
    %p127 = scmp.ne.s32.totalorder %s112, %s126
    %p128 = scmp.eq.s32.totalorder %s18, 0
    %p129 = por %p127, %p128
    %s131 = sadd.s32 %s130, 1
    %p134 = scmp.eq.s32.totalorder %s12, 3
    %p135 = scmp.ne.s32.totalorder %s130, %s132
    %p136 = scmp.eq.s32.totalorder %s12, 0
    %p137 = por %p135, %p136
    %p138 = scmp.ne.s32.totalorder %s130, %s132
    %p139 = scmp.eq.s32.totalorder %s17, 3
    %p140 = por %p138, %p139
    %p141 = scmp.ne.s32.totalorder %s132, %s133
    %p142 = scmp.eq.s32.totalorder %s17, 0
    %p143 = por %p141, %p142
    %p144 = scmp.ne.s32.totalorder %s132, %s133
    %p145 = scmp.eq.s32.totalorder %s18, 3
    %p146 = por %p144, %p145
    %p148 = scmp.ne.s32.totalorder %s133, %s147
    %p149 = scmp.eq.s32.totalorder %s18, 0
    %p150 = por %p148, %p149
    %s152 = sadd.s32 %s151, 1
    %p155 = scmp.eq.s32.totalorder %s12, 3
    %p156 = scmp.ne.s32.totalorder %s151, %s153
    %p157 = scmp.eq.s32.totalorder %s12, 0
    %p158 = por %p156, %p157
    %p159 = scmp.ne.s32.totalorder %s151, %s153
    %p160 = scmp.eq.s32.totalorder %s17, 3
    %p161 = por %p159, %p160
    %p162 = scmp.ne.s32.totalorder %s153, %s154
    %p163 = scmp.eq.s32.totalorder %s17, 0
    %p164 = por %p162, %p163
    %p165 = scmp.ne.s32.totalorder %s153, %s154
    %p166 = scmp.eq.s32.totalorder %s18, 3
    %p167 = por %p165, %p166
    %p169 = scmp.ne.s32.totalorder %s154, %s168
    %p170 = scmp.eq.s32.totalorder %s18, 0
    %p171 = por %p169, %p170
    %p172 = scmp.le.s32.totalorder 1, %s12
    %p173 = scmp.lt.s32.totalorder %s12, 5
    %p174 = pnand %p172, %p173
    %p175 = pneg %p174
    // Predicated region
    $region9: #{lstm_forward.1} parent=5 // pred_check
      _
    $region10: #{lstm_forward.1} parent=5 // pred_check_branch
      %177 = sbr.rel (%p174) target = $region12
    $region11: #{lstm_forward.1} parent=5 // pred_region
      %s178 = ssub.s32 %s12, 1
      // Predicated region
      $region13: #{lstm_forward.1} parent=11 // pred_check
        %p179 = pneg %p59
      $region14: #{lstm_forward.1} parent=11 // pred_check_branch
        %181 = sbr.rel (%p179) target = $region16
      $region15: #{lstm_forward.1} parent=11 // pred_region
        _
      $region16: #{lstm_forward.1} parent=11 // pred_fallthru
        _
      // Predicated region
      $region17: #{lstm_forward.1} parent=11 // pred_check
        %p182 = pneg %p80
      $region18: #{lstm_forward.1} parent=11 // pred_check_branch
        %184 = sbr.rel (%p182) target = $region20
      $region19: #{lstm_forward.1} parent=11 // pred_region
        _
      $region20: #{lstm_forward.1} parent=11 // pred_fallthru
        _
      // Predicated region
      $region21: #{lstm_forward.1} parent=11 // pred_check
        %p185 = pneg %p101
      $region22: #{lstm_forward.1} parent=11 // pred_check_branch
        %187 = sbr.rel (%p185) target = $region24
      $region23: #{lstm_forward.1} parent=11 // pred_region
        _
      $region24: #{lstm_forward.1} parent=11 // pred_fallthru
        _
      // Predicated region
      $region25: #{lstm_forward.1} parent=11 // pred_check
        %p188 = pneg %p122
      $region26: #{lstm_forward.1} parent=11 // pred_check_branch
        %190 = sbr.rel (%p188) target = $region28
      $region27: #{lstm_forward.1} parent=11 // pred_region
        _
      $region28: #{lstm_forward.1} parent=11 // pred_fallthru
        _
      // Predicated region
      $region29: #{lstm_forward.1} parent=11 // pred_check
        %p191 = pneg %p143
      $region30: #{lstm_forward.1} parent=11 // pred_check_branch
        %193 = sbr.rel (%p191) target = $region32
      $region31: #{lstm_forward.1} parent=11 // pred_region
        _
      $region32: #{lstm_forward.1} parent=11 // pred_fallthru
        _
    $region12: #{lstm_forward.1} parent=5 // pred_fallthru
      _
    %p194 = scmp.lt.s32.totalorder %s12, 4
    // Predicated region
    $region33: #{lstm_forward.1} parent=5 // pred_check
      %p195 = pneg %p194
    $region34: #{lstm_forward.1} parent=5 // pred_check_branch
      %197 = sbr.rel (%p195) target = $region36
    $region35: #{lstm_forward.1} parent=5 // pred_region
      // Predicated region
      $region37: #{lstm_forward.1} parent=35 // pred_check
        %p198 = pneg %p32
      $region38: #{lstm_forward.1} parent=35 // pred_check_branch
        %200 = sbr.rel (%p198) target = $region40
      $region39: #{lstm_forward.1} parent=35 // pred_region
        %s201 = smul.u32 16, %s12
        %p202 = scmp.lt.s32.totalorder %s201, 63
        %s203 = scalar_select %p202, %s201, 63
        %s204 = smul.addr %s203, 8
        %s205 = scalar_lea.vmem %s0, %s204
        %s206 = smul.u32 16, %s12
      $region40: #{lstm_forward.1} parent=35 // pred_fallthru
        _
    $region36: #{lstm_forward.1} parent=5 // pred_fallthru
      _
    %p207 = scmp.le.s32.totalorder 1, %s12
    %p208 = scmp.lt.s32.totalorder %s12, 5
    %p209 = pnand %p207, %p208
    %p210 = pneg %p209
    // Predicated region
    $region41: #{lstm_forward.1} parent=5 // pred_check
      _
    $region42: #{lstm_forward.1} parent=5 // pred_check_branch
      %212 = sbr.rel (%p209) target = $region44
    $region43: #{lstm_forward.1} parent=5 // pred_region
      %s213 = ssub.s32 %s12, 1
      %s214 = smul.u32 16, %s17
      %p215 = scmp.lt.s32.totalorder %s214, 63
      %s216 = scalar_select %p215, %s214, 63
      %s217 = smul.addr %s216, 8
      %s218 = scalar_lea.vmem %s0, %s217
      %p219 = pneg %p38
      %p220 = pneg %p35
      %p221 = pneg %p59
      %p222 = pneg %p56
      %p223 = pneg %p80
      %p224 = pneg %p77
      %p225 = pneg %p101
      %p226 = pneg %p98
      %p227 = pneg %p122
      %p228 = pneg %p119
      %p229 = pneg %p143
      %p230 = pneg %p140
      %p231 = pneg %p164
      %p232 = pneg %p161
      %s233 = smul.u32 16, %s17
      %p234 = scmp.lt.s32.totalorder %s233, 63
      %s235 = scalar_select %p234, %s233, 63
      %s236 = smul.addr %s235, 8
      %s237 = scalar_lea.vmem %s0, %s236
      %s238 = smul.u32 16, %s17
      %p239 = scmp.eq.s32.totalorder %s17, 0
      // Predicated region
      $region45: #{lstm_forward.1} parent=43 // pred_check
        %p240 = pneg %p239
      $region46: #{lstm_forward.1} parent=43 // pred_check_branch
        %242 = sbr.rel (%p240) target = $region48
      $region47: #{lstm_forward.1} parent=43 // pred_region
        %v243 = vld [vmem:[%s2] sm:$0xff]
        %v244 = vld [vmem:[%s2 + $0x8] sm:$0xff]
        %v245 = vld [vmem:[%s2 + $0x10] sm:$0xff]
        %v246 = vld [vmem:[%s2 + $0x18] sm:$0xff]
        %vm247 = vcmask 261120
        %248 = vst.msk [vmem:[#allocation2] sm:$0xff] %vm247, %v243
        %249 = vst.msk [vmem:[#allocation2 + $0x8] sm:$0xff] %vm247, %v244
        %250 = vst.msk [vmem:[#allocation2 + $0x10] sm:$0xff] %vm247, %v245
        %251 = vst.msk [vmem:[#allocation2 + $0x18] sm:$0xff] %vm247, %v246
        %v252 = vld [vmem:[%s3] sm:$0xff]
        %v253 = vld [vmem:[%s3 + $0x8] sm:$0xff]
        %v254 = vld [vmem:[%s3 + $0x10] sm:$0xff]
        %v255 = vld [vmem:[%s3 + $0x18] sm:$0xff]
        %256 = vst.msk [vmem:[#allocation3] sm:$0xff] %vm247, %v252
        %257 = vst.msk [vmem:[#allocation3 + $0x8] sm:$0xff] %vm247, %v253
        %258 = vst.msk [vmem:[#allocation3 + $0x10] sm:$0xff] %vm247, %v254
        %259 = vst.msk [vmem:[#allocation3 + $0x18] sm:$0xff] %vm247, %v255
      $region48: #{lstm_forward.1} parent=43 // pred_fallthru
        _
      %v260 = vld [vmem:[%s1] sm:$0xff]
      %v261 = vld [vmem:[%s1 + $0x8] sm:$0xff]
      %v262 = vld [vmem:[%s1 + $0x10] sm:$0xff]
      %v263 = vld [vmem:[%s1 + $0x18] sm:$0xff]
      %v264 = vld [vmem:[#allocation2] sm:$0xff]
      %v265 = vld [vmem:[#allocation2 + $0x8] sm:$0xff]
      %v266 = vld [vmem:[#allocation2 + $0x10] sm:$0xff]
      %v267 = vld [vmem:[#allocation2 + $0x18] sm:$0xff]
      %v268 = vld [vmem:[#allocation3] sm:$0xff]
      %v269 = vld [vmem:[#allocation3 + $0x8] sm:$0xff]
      %v270 = vld [vmem:[#allocation3 + $0x10] sm:$0xff]
      %v271 = vld [vmem:[#allocation3 + $0x18] sm:$0xff]
      %v272 = vld [vmem:[%s237] sm:$0xff]
      %v273 = vld [vmem:[%s237 + $0x8] sm:$0xff]
      %v274 = vld [vmem:[%s237 + $0x10] sm:$0xff]
      %v275 = vld [vmem:[%s237 + $0x18] sm:$0xff]
      %vm276 = vcmask 261120
      %v278 = vsel %vm276, %v264, 0
      %v281 = vsel %vm276, %v265, 0
      %v284 = vsel %vm276, %v266, 0
      %v287 = vsel %vm276, %v267, 0
      %289 = vmatpush.msra.mxu0 0.0
      %290 = vmatpush.msra.mxu0 0.0
      %291 = vmatpush.msra.mxu0 0.0
      %292 = vmatpush.msra.mxu0 0.0
      %293 = vmatpush.msra.mxu0 0.0
      %294 = vmatpush.msra.mxu0 0.0
      %295 = vmatpush.msra.mxu0 0.0
      %296 = vmatpush.msra.mxu0 0.0
      %297 = vmatpush.msra.mxu0 0.0
      %298 = vmatpush.msra.mxu0 0.0
      %299 = vmatpush.msra.mxu0 0.0
      %300 = vmatpush.msra.mxu0 0.0
      %301 = vmatpush.msra.mxu0 %v263
      %302 = vmatpush.msra.mxu0 %v262
      %303 = vmatpush.msra.mxu0 %v261
      %304 = vmatpush.msra.mxu0 %v260
      %305 = vmatmul.f32.gmra.mxu0 %v278
      %v306 = vpop.f32.mrf.mxu0
      %v307 = vadd.f32 0.0, %v306
      %308 = vmatmul.f32.gmra.mxu0 %v281
      %v309 = vpop.f32.mrf.mxu0
      %v310 = vadd.f32 0.0, %v309
      %311 = vmatmul.f32.gmra.mxu0 %v284
      %v312 = vpop.f32.mrf.mxu0
      %v313 = vadd.f32 0.0, %v312
      %314 = vmatmul.f32.gmra.mxu0 %v287
      %v315 = vpop.f32.mrf.mxu0
      %v316 = vadd.f32 0.0, %v315
      %317 = vdwg.mxu0
      %v318 = vadd.f32 %v272, %v307
      %v319 = vadd.f32 %v273, %v310
      %v320 = vadd.f32 %v274, %v313
      %v321 = vadd.f32 %v275, %v316
      %v322 = vxor.u32 %v318, 2147483648
      %v323 = vxor.u32 %v319, 2147483648
      %v324 = vxor.u32 %v320, 2147483648
      %v325 = vxor.u32 %v321, 2147483648
      %v326 = vmul.f32 %v322, 1.442695
      %v327 = vpow.pop %v326
      %v328 = vmul.f32 %v323, 1.442695
      %v329 = vpow.pop %v328
      %v330 = vmul.f32 %v324, 1.442695
      %v331 = vpow.pop %v330
      %v332 = vmul.f32 %v325, 1.442695
      %v333 = vpow.pop %v332
      %v334 = vadd.f32 %v327, 1.0
      %v335 = vadd.f32 %v329, 1.0
      %v336 = vadd.f32 %v331, 1.0
      %v337 = vadd.f32 %v333, 1.0
      %v338 = vrcp.pop %v334
      %v339 = vmul.f32 %v334, %v338
      %v340 = vsub.f32 1.0, %v339
      %v341 = vmul.f32 %v338, %v340
      %v342 = vadd.f32 %v338, %v341
      %vm343 = vweird.f32 %v334
      %vm344 = vweird.f32 %v338
      %vm345 = vmor %vm343, %vm344
      %v346 = vsel %vm345, %v338, %v342
      %v347 = vand.u32 2147483647, %v334
      %vm348 = vcmp.eq.f32.partialorder %v347, 8.507059e+37
      %v349 = vand.u32 %v334, 2147483648
      %v350 = vor.u32 1.1754944e-38, %v349
      %v351 = vsel %vm348, %v350, %v346
      %v352 = vmul.f32 1.0, %v351
      %v353 = vrcp.pop %v335
      %v354 = vmul.f32 %v335, %v353
      %v355 = vsub.f32 1.0, %v354
      %v356 = vmul.f32 %v353, %v355
      %v357 = vadd.f32 %v353, %v356
      %vm358 = vweird.f32 %v335
      %vm359 = vweird.f32 %v353
      %vm360 = vmor %vm358, %vm359
      %v361 = vsel %vm360, %v353, %v357
      %v362 = vand.u32 2147483647, %v335
      %vm363 = vcmp.eq.f32.partialorder %v362, 8.507059e+37
      %v364 = vand.u32 %v335, 2147483648
      %v365 = vor.u32 1.1754944e-38, %v364
      %v366 = vsel %vm363, %v365, %v361
      %v367 = vmul.f32 1.0, %v366
      %v368 = vrcp.pop %v336
      %v369 = vmul.f32 %v336, %v368
      %v370 = vsub.f32 1.0, %v369
      %v371 = vmul.f32 %v368, %v370
      %v372 = vadd.f32 %v368, %v371
      %vm373 = vweird.f32 %v336
      %vm374 = vweird.f32 %v368
      %vm375 = vmor %vm373, %vm374
      %v376 = vsel %vm375, %v368, %v372
      %v377 = vand.u32 2147483647, %v336
      %vm378 = vcmp.eq.f32.partialorder %v377, 8.507059e+37
      %v379 = vand.u32 %v336, 2147483648
      %v380 = vor.u32 1.1754944e-38, %v379
      %v381 = vsel %vm378, %v380, %v376
      %v382 = vmul.f32 1.0, %v381
      %v383 = vrcp.pop %v337
      %v384 = vmul.f32 %v337, %v383
      %v385 = vsub.f32 1.0, %v384
      %v386 = vmul.f32 %v383, %v385
      %v387 = vadd.f32 %v383, %v386
      %vm388 = vweird.f32 %v337
      %vm389 = vweird.f32 %v383
      %vm390 = vmor %vm388, %vm389
      %v391 = vsel %vm390, %v383, %v387
      %v392 = vand.u32 2147483647, %v337
      %vm393 = vcmp.eq.f32.partialorder %v392, 8.507059e+37
      %v394 = vand.u32 %v337, 2147483648
      %v395 = vor.u32 1.1754944e-38, %v394
      %v396 = vsel %vm393, %v395, %v391
      %v397 = vmul.f32 1.0, %v396
      %v398 = vtanh.pop %v318
      %v399 = vtanh.pop %v319
      %v400 = vtanh.pop %v320
      %v401 = vtanh.pop %v321
      %406 = vrot.lane.b32.xlu0 %v268, 32
      %v407 = vpop.permute.xlu0 %406
      %408 = vrot.lane.b32.xlu0 %v269, 32
      %v409 = vpop.permute.xlu0 %408
      %410 = vrot.lane.b32.xlu0 %v270, 32
      %v411 = vpop.permute.xlu0 %410
      %412 = vrot.lane.b32.xlu0 %v271, 32
      %v413 = vpop.permute.xlu0 %412
      %v418 = vmul.f32 %v352, %v407
      %v419 = vmul.f32 %v367, %v409
      %v420 = vmul.f32 %v382, %v411
      %v421 = vmul.f32 %v397, %v413
      %426 = vrot.lane.b32.xlu0 %v398, 64
      %v427 = vpop.permute.xlu0 %426
      %428 = vrot.lane.b32.xlu0 %v399, 64
      %v429 = vpop.permute.xlu0 %428
      %430 = vrot.lane.b32.xlu0 %v400, 64
      %v431 = vpop.permute.xlu0 %430
      %432 = vrot.lane.b32.xlu0 %v401, 64
      %v433 = vpop.permute.xlu0 %432
      %v438 = vmul.f32 %v352, %v427
      %v439 = vmul.f32 %v367, %v429
      %v440 = vmul.f32 %v382, %v431
      %v441 = vmul.f32 %v397, %v433
      %446 = vrot.lane.b32.xlu0 %v438, 32
      %v447 = vpop.permute.xlu0 %446
      %448 = vrot.lane.b32.xlu0 %v439, 32
      %v449 = vpop.permute.xlu0 %448
      %450 = vrot.lane.b32.xlu0 %v440, 32
      %v451 = vpop.permute.xlu0 %450
      %452 = vrot.lane.b32.xlu0 %v441, 32
      %v453 = vpop.permute.xlu0 %452
      %v458 = vadd.f32 %v418, %v447
      %v459 = vadd.f32 %v419, %v449
      %v460 = vadd.f32 %v420, %v451
      %v461 = vadd.f32 %v421, %v453
      %v462 = vtanh.pop %v458
      %v463 = vtanh.pop %v459
      %v464 = vtanh.pop %v460
      %v465 = vtanh.pop %v461
      %470 = vrot.lane.b32.xlu0 %v462, 64
      %v471 = vpop.permute.xlu0 %470
      %472 = vrot.lane.b32.xlu0 %v463, 64
      %v473 = vpop.permute.xlu0 %472
      %474 = vrot.lane.b32.xlu0 %v464, 64
      %v475 = vpop.permute.xlu0 %474
      %476 = vrot.lane.b32.xlu0 %v465, 64
      %v477 = vpop.permute.xlu0 %476
      %v482 = vmul.f32 %v352, %v471
      %v483 = vmul.f32 %v367, %v473
      %v484 = vmul.f32 %v382, %v475
      %v485 = vmul.f32 %v397, %v477
      %s486 = scalar_lea.vmem %s237, 32
      %v487 = vld [vmem:[%s486] sm:$0xff]
      %v488 = vld [vmem:[%s486 + $0x8] sm:$0xff]
      %v489 = vld [vmem:[%s486 + $0x10] sm:$0xff]
      %v490 = vld [vmem:[%s486 + $0x18] sm:$0xff]
      %495 = vrot.lane.b32.xlu0 %v482, 32
      %v496 = vpop.permute.xlu0 %495
      %497 = vrot.lane.b32.xlu0 %v483, 32
      %v498 = vpop.permute.xlu0 %497
      %499 = vrot.lane.b32.xlu0 %v484, 32
      %v500 = vpop.permute.xlu0 %499
      %501 = vrot.lane.b32.xlu0 %v485, 32
      %v502 = vpop.permute.xlu0 %501
      %v503 = vsel %vm276, %v496, 0
      %v505 = vsel %vm276, %v498, 0
      %v507 = vsel %vm276, %v500, 0
      %v509 = vsel %vm276, %v502, 0
      %511 = vmatpush.msra.mxu0 0.0
      %512 = vmatpush.msra.mxu0 0.0
      %513 = vmatpush.msra.mxu0 0.0
      %514 = vmatpush.msra.mxu0 0.0
      %515 = vmatpush.msra.mxu0 0.0
      %516 = vmatpush.msra.mxu0 0.0
      %517 = vmatpush.msra.mxu0 0.0
      %518 = vmatpush.msra.mxu0 0.0
      %519 = vmatpush.msra.mxu0 0.0
      %520 = vmatpush.msra.mxu0 0.0
      %521 = vmatpush.msra.mxu0 0.0
      %522 = vmatpush.msra.mxu0 0.0
      %523 = vmatpush.msra.mxu0 %v263
      %524 = vmatpush.msra.mxu0 %v262
      %525 = vmatpush.msra.mxu0 %v261
      %526 = vmatpush.msra.mxu0 %v260
      %527 = vmatmul.f32.gmra.mxu0 %v503
      %v528 = vpop.f32.mrf.mxu0
      %v529 = vadd.f32 0.0, %v528
      %530 = vmatmul.f32.gmra.mxu0 %v505
      %v531 = vpop.f32.mrf.mxu0
      %v532 = vadd.f32 0.0, %v531
      %533 = vmatmul.f32.gmra.mxu0 %v507
      %v534 = vpop.f32.mrf.mxu0
      %v535 = vadd.f32 0.0, %v534
      %536 = vmatmul.f32.gmra.mxu0 %v509
      %v537 = vpop.f32.mrf.mxu0
      %v538 = vadd.f32 0.0, %v537
      %539 = vdwg.mxu0
      %v540 = vadd.f32 %v487, %v529
      %v541 = vadd.f32 %v488, %v532
      %v542 = vadd.f32 %v489, %v535
      %v543 = vadd.f32 %v490, %v538
      %v544 = vxor.u32 %v540, 2147483648
      %v545 = vxor.u32 %v541, 2147483648
      %v546 = vxor.u32 %v542, 2147483648
      %v547 = vxor.u32 %v543, 2147483648
      %v548 = vmul.f32 %v544, 1.442695
      %v549 = vpow.pop %v548
      %v550 = vmul.f32 %v545, 1.442695
      %v551 = vpow.pop %v550
      %v552 = vmul.f32 %v546, 1.442695
      %v553 = vpow.pop %v552
      %v554 = vmul.f32 %v547, 1.442695
      %v555 = vpow.pop %v554
      %v556 = vadd.f32 %v549, 1.0
      %v557 = vadd.f32 %v551, 1.0
      %v558 = vadd.f32 %v553, 1.0
      %v559 = vadd.f32 %v555, 1.0
      %v560 = vrcp.pop %v556
      %v561 = vmul.f32 %v556, %v560
      %v562 = vsub.f32 1.0, %v561
      %v563 = vmul.f32 %v560, %v562
      %v564 = vadd.f32 %v560, %v563
      %vm565 = vweird.f32 %v556
      %vm566 = vweird.f32 %v560
      %vm567 = vmor %vm565, %vm566
      %v568 = vsel %vm567, %v560, %v564
      %v569 = vand.u32 2147483647, %v556
      %vm570 = vcmp.eq.f32.partialorder %v569, 8.507059e+37
      %v571 = vand.u32 %v556, 2147483648
      %v572 = vor.u32 1.1754944e-38, %v571
      %v573 = vsel %vm570, %v572, %v568
      %v574 = vmul.f32 1.0, %v573
      %v575 = vrcp.pop %v557
      %v576 = vmul.f32 %v557, %v575
      %v577 = vsub.f32 1.0, %v576
      %v578 = vmul.f32 %v575, %v577
      %v579 = vadd.f32 %v575, %v578
      %vm580 = vweird.f32 %v557
      %vm581 = vweird.f32 %v575
      %vm582 = vmor %vm580, %vm581
      %v583 = vsel %vm582, %v575, %v579
      %v584 = vand.u32 2147483647, %v557
      %vm585 = vcmp.eq.f32.partialorder %v584, 8.507059e+37
      %v586 = vand.u32 %v557, 2147483648
      %v587 = vor.u32 1.1754944e-38, %v586
      %v588 = vsel %vm585, %v587, %v583
      %v589 = vmul.f32 1.0, %v588
      %v590 = vrcp.pop %v558
      %v591 = vmul.f32 %v558, %v590
      %v592 = vsub.f32 1.0, %v591
      %v593 = vmul.f32 %v590, %v592
      %v594 = vadd.f32 %v590, %v593
      %vm595 = vweird.f32 %v558
      %vm596 = vweird.f32 %v590
      %vm597 = vmor %vm595, %vm596
      %v598 = vsel %vm597, %v590, %v594
      %v599 = vand.u32 2147483647, %v558
      %vm600 = vcmp.eq.f32.partialorder %v599, 8.507059e+37
      %v601 = vand.u32 %v558, 2147483648
      %v602 = vor.u32 1.1754944e-38, %v601
      %v603 = vsel %vm600, %v602, %v598
      %v604 = vmul.f32 1.0, %v603
      %v605 = vrcp.pop %v559
      %v606 = vmul.f32 %v559, %v605
      %v607 = vsub.f32 1.0, %v606
      %v608 = vmul.f32 %v605, %v607
      %v609 = vadd.f32 %v605, %v608
      %vm610 = vweird.f32 %v559
      %vm611 = vweird.f32 %v605
      %vm612 = vmor %vm610, %vm611
      %v613 = vsel %vm612, %v605, %v609
      %v614 = vand.u32 2147483647, %v559
      %vm615 = vcmp.eq.f32.partialorder %v614, 8.507059e+37
      %v616 = vand.u32 %v559, 2147483648
      %v617 = vor.u32 1.1754944e-38, %v616
      %v618 = vsel %vm615, %v617, %v613
      %v619 = vmul.f32 1.0, %v618
      %v620 = vtanh.pop %v540
      %v621 = vtanh.pop %v541
      %v622 = vtanh.pop %v542
      %v623 = vtanh.pop %v543
      %v624 = vmul.f32 %v574, %v458
      %v625 = vmul.f32 %v589, %v459
      %v626 = vmul.f32 %v604, %v460
      %v627 = vmul.f32 %v619, %v461
      %632 = vrot.lane.b32.xlu0 %v620, 64
      %v633 = vpop.permute.xlu0 %632
      %634 = vrot.lane.b32.xlu0 %v621, 64
      %v635 = vpop.permute.xlu0 %634
      %636 = vrot.lane.b32.xlu0 %v622, 64
      %v637 = vpop.permute.xlu0 %636
      %638 = vrot.lane.b32.xlu0 %v623, 64
      %v639 = vpop.permute.xlu0 %638
      %v644 = vmul.f32 %v574, %v633
      %v645 = vmul.f32 %v589, %v635
      %v646 = vmul.f32 %v604, %v637
      %v647 = vmul.f32 %v619, %v639
      %652 = vrot.lane.b32.xlu0 %v644, 32
      %v653 = vpop.permute.xlu0 %652
      %654 = vrot.lane.b32.xlu0 %v645, 32
      %v655 = vpop.permute.xlu0 %654
      %656 = vrot.lane.b32.xlu0 %v646, 32
      %v657 = vpop.permute.xlu0 %656
      %658 = vrot.lane.b32.xlu0 %v647, 32
      %v659 = vpop.permute.xlu0 %658
      %v664 = vadd.f32 %v624, %v653
      %v665 = vadd.f32 %v625, %v655
      %v666 = vadd.f32 %v626, %v657
      %v667 = vadd.f32 %v627, %v659
      %v668 = vtanh.pop %v664
      %v669 = vtanh.pop %v665
      %v670 = vtanh.pop %v666
      %v671 = vtanh.pop %v667
      %676 = vrot.lane.b32.xlu0 %v668, 64
      %v677 = vpop.permute.xlu0 %676
      %678 = vrot.lane.b32.xlu0 %v669, 64
      %v679 = vpop.permute.xlu0 %678
      %680 = vrot.lane.b32.xlu0 %v670, 64
      %v681 = vpop.permute.xlu0 %680
      %682 = vrot.lane.b32.xlu0 %v671, 64
      %v683 = vpop.permute.xlu0 %682
      %v688 = vmul.f32 %v574, %v677
      %v689 = vmul.f32 %v589, %v679
      %v690 = vmul.f32 %v604, %v681
      %v691 = vmul.f32 %v619, %v683
      %s692 = scalar_lea.vmem %s237, 64
      %v693 = vld [vmem:[%s692] sm:$0xff]
      %v694 = vld [vmem:[%s692 + $0x8] sm:$0xff]
      %v695 = vld [vmem:[%s692 + $0x10] sm:$0xff]
      %v696 = vld [vmem:[%s692 + $0x18] sm:$0xff]
      %701 = vrot.lane.b32.xlu0 %v688, 32
      %v702 = vpop.permute.xlu0 %701
      %703 = vrot.lane.b32.xlu0 %v689, 32
      %v704 = vpop.permute.xlu0 %703
      %705 = vrot.lane.b32.xlu0 %v690, 32
      %v706 = vpop.permute.xlu0 %705
      %707 = vrot.lane.b32.xlu0 %v691, 32
      %v708 = vpop.permute.xlu0 %707
      %v709 = vsel %vm276, %v702, 0
      %v711 = vsel %vm276, %v704, 0
      %v713 = vsel %vm276, %v706, 0
      %v715 = vsel %vm276, %v708, 0
      %717 = vmatpush.msra.mxu0 0.0
      %718 = vmatpush.msra.mxu0 0.0
      %719 = vmatpush.msra.mxu0 0.0
      %720 = vmatpush.msra.mxu0 0.0
      %721 = vmatpush.msra.mxu0 0.0
      %722 = vmatpush.msra.mxu0 0.0
      %723 = vmatpush.msra.mxu0 0.0
      %724 = vmatpush.msra.mxu0 0.0
      %725 = vmatpush.msra.mxu0 0.0
      %726 = vmatpush.msra.mxu0 0.0
      %727 = vmatpush.msra.mxu0 0.0
      %728 = vmatpush.msra.mxu0 0.0
      %729 = vmatpush.msra.mxu0 %v263
      %730 = vmatpush.msra.mxu0 %v262
      %731 = vmatpush.msra.mxu0 %v261
      %732 = vmatpush.msra.mxu0 %v260
      %733 = vmatmul.f32.gmra.mxu0 %v709
      %v734 = vpop.f32.mrf.mxu0
      %v735 = vadd.f32 0.0, %v734
      %736 = vmatmul.f32.gmra.mxu0 %v711
      %v737 = vpop.f32.mrf.mxu0
      %v738 = vadd.f32 0.0, %v737
      %739 = vmatmul.f32.gmra.mxu0 %v713
      %v740 = vpop.f32.mrf.mxu0
      %v741 = vadd.f32 0.0, %v740
      %742 = vmatmul.f32.gmra.mxu0 %v715
      %v743 = vpop.f32.mrf.mxu0
      %v744 = vadd.f32 0.0, %v743
      %745 = vdwg.mxu0
      %v746 = vadd.f32 %v693, %v735
      %v747 = vadd.f32 %v694, %v738
      %v748 = vadd.f32 %v695, %v741
      %v749 = vadd.f32 %v696, %v744
      %v750 = vxor.u32 %v746, 2147483648
      %v751 = vxor.u32 %v747, 2147483648
      %v752 = vxor.u32 %v748, 2147483648
      %v753 = vxor.u32 %v749, 2147483648
      %v754 = vmul.f32 %v750, 1.442695
      %v755 = vpow.pop %v754
      %v756 = vmul.f32 %v751, 1.442695
      %v757 = vpow.pop %v756
      %v758 = vmul.f32 %v752, 1.442695
      %v759 = vpow.pop %v758
      %v760 = vmul.f32 %v753, 1.442695
      %v761 = vpow.pop %v760
      %v762 = vadd.f32 %v755, 1.0
      %v763 = vadd.f32 %v757, 1.0
      %v764 = vadd.f32 %v759, 1.0
      %v765 = vadd.f32 %v761, 1.0
      %v766 = vrcp.pop %v762
      %v767 = vmul.f32 %v762, %v766
      %v768 = vsub.f32 1.0, %v767
      %v769 = vmul.f32 %v766, %v768
      %v770 = vadd.f32 %v766, %v769
      %vm771 = vweird.f32 %v762
      %vm772 = vweird.f32 %v766
      %vm773 = vmor %vm771, %vm772
      %v774 = vsel %vm773, %v766, %v770
      %v775 = vand.u32 2147483647, %v762
      %vm776 = vcmp.eq.f32.partialorder %v775, 8.507059e+37
      %v777 = vand.u32 %v762, 2147483648
      %v778 = vor.u32 1.1754944e-38, %v777
      %v779 = vsel %vm776, %v778, %v774
      %v780 = vmul.f32 1.0, %v779
      %v781 = vrcp.pop %v763
      %v782 = vmul.f32 %v763, %v781
      %v783 = vsub.f32 1.0, %v782
      %v784 = vmul.f32 %v781, %v783
      %v785 = vadd.f32 %v781, %v784
      %vm786 = vweird.f32 %v763
      %vm787 = vweird.f32 %v781
      %vm788 = vmor %vm786, %vm787
      %v789 = vsel %vm788, %v781, %v785
      %v790 = vand.u32 2147483647, %v763
      %vm791 = vcmp.eq.f32.partialorder %v790, 8.507059e+37
      %v792 = vand.u32 %v763, 2147483648
      %v793 = vor.u32 1.1754944e-38, %v792
      %v794 = vsel %vm791, %v793, %v789
      %v795 = vmul.f32 1.0, %v794
      %v796 = vrcp.pop %v764
      %v797 = vmul.f32 %v764, %v796
      %v798 = vsub.f32 1.0, %v797
      %v799 = vmul.f32 %v796, %v798
      %v800 = vadd.f32 %v796, %v799
      %vm801 = vweird.f32 %v764
      %vm802 = vweird.f32 %v796
      %vm803 = vmor %vm801, %vm802
      %v804 = vsel %vm803, %v796, %v800
      %v805 = vand.u32 2147483647, %v764
      %vm806 = vcmp.eq.f32.partialorder %v805, 8.507059e+37
      %v807 = vand.u32 %v764, 2147483648
      %v808 = vor.u32 1.1754944e-38, %v807
      %v809 = vsel %vm806, %v808, %v804
      %v810 = vmul.f32 1.0, %v809
      %v811 = vrcp.pop %v765
      %v812 = vmul.f32 %v765, %v811
      %v813 = vsub.f32 1.0, %v812
      %v814 = vmul.f32 %v811, %v813
      %v815 = vadd.f32 %v811, %v814
      %vm816 = vweird.f32 %v765
      %vm817 = vweird.f32 %v811
      %vm818 = vmor %vm816, %vm817
      %v819 = vsel %vm818, %v811, %v815
      %v820 = vand.u32 2147483647, %v765
      %vm821 = vcmp.eq.f32.partialorder %v820, 8.507059e+37
      %v822 = vand.u32 %v765, 2147483648
      %v823 = vor.u32 1.1754944e-38, %v822
      %v824 = vsel %vm821, %v823, %v819
      %v825 = vmul.f32 1.0, %v824
      %v826 = vtanh.pop %v746
      %v827 = vtanh.pop %v747
      %v828 = vtanh.pop %v748
      %v829 = vtanh.pop %v749
      %v830 = vmul.f32 %v780, %v664
      %v831 = vmul.f32 %v795, %v665
      %v832 = vmul.f32 %v810, %v666
      %v833 = vmul.f32 %v825, %v667
      %838 = vrot.lane.b32.xlu0 %v826, 64
      %v839 = vpop.permute.xlu0 %838
      %840 = vrot.lane.b32.xlu0 %v827, 64
      %v841 = vpop.permute.xlu0 %840
      %842 = vrot.lane.b32.xlu0 %v828, 64
      %v843 = vpop.permute.xlu0 %842
      %844 = vrot.lane.b32.xlu0 %v829, 64
      %v845 = vpop.permute.xlu0 %844
      %v850 = vmul.f32 %v780, %v839
      %v851 = vmul.f32 %v795, %v841
      %v852 = vmul.f32 %v810, %v843
      %v853 = vmul.f32 %v825, %v845
      %858 = vrot.lane.b32.xlu0 %v850, 32
      %v859 = vpop.permute.xlu0 %858
      %860 = vrot.lane.b32.xlu0 %v851, 32
      %v861 = vpop.permute.xlu0 %860
      %862 = vrot.lane.b32.xlu0 %v852, 32
      %v863 = vpop.permute.xlu0 %862
      %864 = vrot.lane.b32.xlu0 %v853, 32
      %v865 = vpop.permute.xlu0 %864
      %v870 = vadd.f32 %v830, %v859
      %v871 = vadd.f32 %v831, %v861
      %v872 = vadd.f32 %v832, %v863
      %v873 = vadd.f32 %v833, %v865
      %v874 = vtanh.pop %v870
      %v875 = vtanh.pop %v871
      %v876 = vtanh.pop %v872
      %v877 = vtanh.pop %v873
      %882 = vrot.lane.b32.xlu0 %v874, 64
      %v883 = vpop.permute.xlu0 %882
      %884 = vrot.lane.b32.xlu0 %v875, 64
      %v885 = vpop.permute.xlu0 %884
      %886 = vrot.lane.b32.xlu0 %v876, 64
      %v887 = vpop.permute.xlu0 %886
      %888 = vrot.lane.b32.xlu0 %v877, 64
      %v889 = vpop.permute.xlu0 %888
      %v894 = vmul.f32 %v780, %v883
      %v895 = vmul.f32 %v795, %v885
      %v896 = vmul.f32 %v810, %v887
      %v897 = vmul.f32 %v825, %v889
      %s898 = scalar_lea.vmem %s237, 96
      %v899 = vld [vmem:[%s898] sm:$0xff]
      %v900 = vld [vmem:[%s898 + $0x8] sm:$0xff]
      %v901 = vld [vmem:[%s898 + $0x10] sm:$0xff]
      %v902 = vld [vmem:[%s898 + $0x18] sm:$0xff]
      %907 = vrot.lane.b32.xlu0 %v894, 32
      %v908 = vpop.permute.xlu0 %907
      %909 = vrot.lane.b32.xlu0 %v895, 32
      %v910 = vpop.permute.xlu0 %909
      %911 = vrot.lane.b32.xlu0 %v896, 32
      %v912 = vpop.permute.xlu0 %911
      %913 = vrot.lane.b32.xlu0 %v897, 32
      %v914 = vpop.permute.xlu0 %913
      %v915 = vsel %vm276, %v908, 0
      %v917 = vsel %vm276, %v910, 0
      %v919 = vsel %vm276, %v912, 0
      %v921 = vsel %vm276, %v914, 0
      %923 = vmatpush.msra.mxu0 0.0
      %924 = vmatpush.msra.mxu0 0.0
      %925 = vmatpush.msra.mxu0 0.0
      %926 = vmatpush.msra.mxu0 0.0
      %927 = vmatpush.msra.mxu0 0.0
      %928 = vmatpush.msra.mxu0 0.0
      %929 = vmatpush.msra.mxu0 0.0
      %930 = vmatpush.msra.mxu0 0.0
      %931 = vmatpush.msra.mxu0 0.0
      %932 = vmatpush.msra.mxu0 0.0
      %933 = vmatpush.msra.mxu0 0.0
      %934 = vmatpush.msra.mxu0 0.0
      %935 = vmatpush.msra.mxu0 %v263
      %936 = vmatpush.msra.mxu0 %v262
      %937 = vmatpush.msra.mxu0 %v261
      %938 = vmatpush.msra.mxu0 %v260
      %939 = vmatmul.f32.gmra.mxu0 %v915
      %v940 = vpop.f32.mrf.mxu0
      %v941 = vadd.f32 0.0, %v940
      %942 = vmatmul.f32.gmra.mxu0 %v917
      %v943 = vpop.f32.mrf.mxu0
      %v944 = vadd.f32 0.0, %v943
      %945 = vmatmul.f32.gmra.mxu0 %v919
      %v946 = vpop.f32.mrf.mxu0
      %v947 = vadd.f32 0.0, %v946
      %948 = vmatmul.f32.gmra.mxu0 %v921
      %v949 = vpop.f32.mrf.mxu0
      %v950 = vadd.f32 0.0, %v949
      %951 = vdwg.mxu0
      %v952 = vadd.f32 %v899, %v941
      %v953 = vadd.f32 %v900, %v944
      %v954 = vadd.f32 %v901, %v947
      %v955 = vadd.f32 %v902, %v950
      %v956 = vxor.u32 %v952, 2147483648
      %v957 = vxor.u32 %v953, 2147483648
      %v958 = vxor.u32 %v954, 2147483648
      %v959 = vxor.u32 %v955, 2147483648
      %v960 = vmul.f32 %v956, 1.442695
      %v961 = vpow.pop %v960
      %v962 = vmul.f32 %v957, 1.442695
      %v963 = vpow.pop %v962
      %v964 = vmul.f32 %v958, 1.442695
      %v965 = vpow.pop %v964
      %v966 = vmul.f32 %v959, 1.442695
      %v967 = vpow.pop %v966
      %v968 = vadd.f32 %v961, 1.0
      %v969 = vadd.f32 %v963, 1.0
      %v970 = vadd.f32 %v965, 1.0
      %v971 = vadd.f32 %v967, 1.0
      %v972 = vrcp.pop %v968
      %v973 = vmul.f32 %v968, %v972
      %v974 = vsub.f32 1.0, %v973
      %v975 = vmul.f32 %v972, %v974
      %v976 = vadd.f32 %v972, %v975
      %vm977 = vweird.f32 %v968
      %vm978 = vweird.f32 %v972
      %vm979 = vmor %vm977, %vm978
      %v980 = vsel %vm979, %v972, %v976
      %v981 = vand.u32 2147483647, %v968
      %vm982 = vcmp.eq.f32.partialorder %v981, 8.507059e+37
      %v983 = vand.u32 %v968, 2147483648
      %v984 = vor.u32 1.1754944e-38, %v983
      %v985 = vsel %vm982, %v984, %v980
      %v986 = vmul.f32 1.0, %v985
      %v987 = vrcp.pop %v969
      %v988 = vmul.f32 %v969, %v987
      %v989 = vsub.f32 1.0, %v988
      %v990 = vmul.f32 %v987, %v989
      %v991 = vadd.f32 %v987, %v990
      %vm992 = vweird.f32 %v969
      %vm993 = vweird.f32 %v987
      %vm994 = vmor %vm992, %vm993
      %v995 = vsel %vm994, %v987, %v991
      %v996 = vand.u32 2147483647, %v969
      %vm997 = vcmp.eq.f32.partialorder %v996, 8.507059e+37
      %v998 = vand.u32 %v969, 2147483648
      %v999 = vor.u32 1.1754944e-38, %v998
      %v1000 = vsel %vm997, %v999, %v995
      %v1001 = vmul.f32 1.0, %v1000
      %v1002 = vrcp.pop %v970
      %v1003 = vmul.f32 %v970, %v1002
      %v1004 = vsub.f32 1.0, %v1003
      %v1005 = vmul.f32 %v1002, %v1004
      %v1006 = vadd.f32 %v1002, %v1005
      %vm1007 = vweird.f32 %v970
      %vm1008 = vweird.f32 %v1002
      %vm1009 = vmor %vm1007, %vm1008
      %v1010 = vsel %vm1009, %v1002, %v1006
      %v1011 = vand.u32 2147483647, %v970
      %vm1012 = vcmp.eq.f32.partialorder %v1011, 8.507059e+37
      %v1013 = vand.u32 %v970, 2147483648
      %v1014 = vor.u32 1.1754944e-38, %v1013
      %v1015 = vsel %vm1012, %v1014, %v1010
      %v1016 = vmul.f32 1.0, %v1015
      %v1017 = vrcp.pop %v971
      %v1018 = vmul.f32 %v971, %v1017
      %v1019 = vsub.f32 1.0, %v1018
      %v1020 = vmul.f32 %v1017, %v1019
      %v1021 = vadd.f32 %v1017, %v1020
      %vm1022 = vweird.f32 %v971
      %vm1023 = vweird.f32 %v1017
      %vm1024 = vmor %vm1022, %vm1023
      %v1025 = vsel %vm1024, %v1017, %v1021
      %v1026 = vand.u32 2147483647, %v971
      %vm1027 = vcmp.eq.f32.partialorder %v1026, 8.507059e+37
      %v1028 = vand.u32 %v971, 2147483648
      %v1029 = vor.u32 1.1754944e-38, %v1028
      %v1030 = vsel %vm1027, %v1029, %v1025
      %v1031 = vmul.f32 1.0, %v1030
      %v1032 = vtanh.pop %v952
      %v1033 = vtanh.pop %v953
      %v1034 = vtanh.pop %v954
      %v1035 = vtanh.pop %v955
      %v1036 = vmul.f32 %v986, %v870
      %v1037 = vmul.f32 %v1001, %v871
      %v1038 = vmul.f32 %v1016, %v872
      %v1039 = vmul.f32 %v1031, %v873
      %1044 = vrot.lane.b32.xlu0 %v1032, 64
      %v1045 = vpop.permute.xlu0 %1044
      %1046 = vrot.lane.b32.xlu0 %v1033, 64
      %v1047 = vpop.permute.xlu0 %1046
      %1048 = vrot.lane.b32.xlu0 %v1034, 64
      %v1049 = vpop.permute.xlu0 %1048
      %1050 = vrot.lane.b32.xlu0 %v1035, 64
      %v1051 = vpop.permute.xlu0 %1050
      %v1056 = vmul.f32 %v986, %v1045
      %v1057 = vmul.f32 %v1001, %v1047
      %v1058 = vmul.f32 %v1016, %v1049
      %v1059 = vmul.f32 %v1031, %v1051
      %1064 = vrot.lane.b32.xlu0 %v1056, 32
      %v1065 = vpop.permute.xlu0 %1064
      %1066 = vrot.lane.b32.xlu0 %v1057, 32
      %v1067 = vpop.permute.xlu0 %1066
      %1068 = vrot.lane.b32.xlu0 %v1058, 32
      %v1069 = vpop.permute.xlu0 %1068
      %1070 = vrot.lane.b32.xlu0 %v1059, 32
      %v1071 = vpop.permute.xlu0 %1070
      %v1076 = vadd.f32 %v1036, %v1065
      %v1077 = vadd.f32 %v1037, %v1067
      %v1078 = vadd.f32 %v1038, %v1069
      %v1079 = vadd.f32 %v1039, %v1071
      %v1080 = vtanh.pop %v1076
      %v1081 = vtanh.pop %v1077
      %v1082 = vtanh.pop %v1078
      %v1083 = vtanh.pop %v1079
      %1088 = vrot.lane.b32.xlu0 %v1080, 64
      %v1089 = vpop.permute.xlu0 %1088
      %1090 = vrot.lane.b32.xlu0 %v1081, 64
      %v1091 = vpop.permute.xlu0 %1090
      %1092 = vrot.lane.b32.xlu0 %v1082, 64
      %v1093 = vpop.permute.xlu0 %1092
      %1094 = vrot.lane.b32.xlu0 %v1083, 64
      %v1095 = vpop.permute.xlu0 %1094
      %v1100 = vmul.f32 %v986, %v1089
      %v1101 = vmul.f32 %v1001, %v1091
      %v1102 = vmul.f32 %v1016, %v1093
      %v1103 = vmul.f32 %v1031, %v1095
      %1108 = vrot.lane.b32.xlu0 %v1100, 32
      %v1109 = vpop.permute.xlu0 %1108
      %1110 = vrot.lane.b32.xlu0 %v1101, 32
      %v1111 = vpop.permute.xlu0 %1110
      %1112 = vrot.lane.b32.xlu0 %v1102, 32
      %v1113 = vpop.permute.xlu0 %1112
      %1114 = vrot.lane.b32.xlu0 %v1103, 32
      %v1115 = vpop.permute.xlu0 %1114
      %1120 = vst.msk [vmem:[#allocation2] sm:$0xff] %vm276, %v1109
      %1121 = vst.msk [vmem:[#allocation2 + $0x8] sm:$0xff] %vm276, %v1111
      %1122 = vst.msk [vmem:[#allocation2 + $0x10] sm:$0xff] %vm276, %v1113
      %1123 = vst.msk [vmem:[#allocation2 + $0x18] sm:$0xff] %vm276, %v1115
      %1128 = vrot.lane.b32.xlu0 %v1076, 96
      %v1129 = vpop.permute.xlu0 %1128
      %1130 = vrot.lane.b32.xlu0 %v1077, 96
      %v1131 = vpop.permute.xlu0 %1130
      %1132 = vrot.lane.b32.xlu0 %v1078, 96
      %v1133 = vpop.permute.xlu0 %1132
      %1134 = vrot.lane.b32.xlu0 %v1079, 96
      %v1135 = vpop.permute.xlu0 %1134
      %1140 = vst.msk [vmem:[#allocation3] sm:$0xff] %vm276, %v1129
      %1141 = vst.msk [vmem:[#allocation3 + $0x8] sm:$0xff] %vm276, %v1131
      %1142 = vst.msk [vmem:[#allocation3 + $0x10] sm:$0xff] %vm276, %v1133
      %1143 = vst.msk [vmem:[#allocation3 + $0x18] sm:$0xff] %vm276, %v1135
      %p1144 = scmp.eq.s32.totalorder %s17, 3
      // Predicated region
      $region49: #{lstm_forward.1} parent=43 // pred_check
        %p1145 = pneg %p1144
      $region50: #{lstm_forward.1} parent=43 // pred_check_branch
        %1147 = sbr.rel (%p1145) target = $region52
      $region51: #{lstm_forward.1} parent=43 // pred_region
        %v1148 = vld [vmem:[%s4] sm:$0xff]
        %v1149 = vld [vmem:[%s4 + $0x8] sm:$0xff]
        %v1150 = vld [vmem:[%s4 + $0x10] sm:$0xff]
        %v1151 = vld [vmem:[%s4 + $0x18] sm:$0xff]
        %v1152 = vld [vmem:[%s5] sm:$0x1]
        %v1154 = vperm.slane %v1152, 0
        %v1156 = vsel %vm276, %v1109, 0
        %v1158 = vsel %vm276, %v1111, 0
        %v1160 = vsel %vm276, %v1113, 0
        %v1162 = vsel %vm276, %v1115, 0
        %1164 = vmatpush.msra.mxu0 0.0
        %1165 = vmatpush.msra.mxu0 0.0
        %1166 = vmatpush.msra.mxu0 0.0
        %1167 = vmatpush.msra.mxu0 0.0
        %1168 = vmatpush.msra.mxu0 0.0
        %1169 = vmatpush.msra.mxu0 0.0
        %1170 = vmatpush.msra.mxu0 0.0
        %1171 = vmatpush.msra.mxu0 0.0
        %1172 = vmatpush.msra.mxu0 0.0
        %1173 = vmatpush.msra.mxu0 0.0
        %1174 = vmatpush.msra.mxu0 0.0
        %1175 = vmatpush.msra.mxu0 0.0
        %1176 = vmatpush.msra.mxu0 %v1151
        %1177 = vmatpush.msra.mxu0 %v1150
        %1178 = vmatpush.msra.mxu0 %v1149
        %1179 = vmatpush.msra.mxu0 %v1148
        %1180 = vmatmul.f32.gmra.mxu0 %v1156
        %v1181 = vpop.f32.mrf.mxu0
        %v1182 = vadd.f32 %v1154, %v1181
        %1183 = vmatmul.f32.gmra.mxu0 %v1158
        %v1184 = vpop.f32.mrf.mxu0
        %v1185 = vadd.f32 %v1154, %v1184
        %1186 = vmatmul.f32.gmra.mxu0 %v1160
        %v1187 = vpop.f32.mrf.mxu0
        %v1188 = vadd.f32 %v1154, %v1187
        %1189 = vmatmul.f32.gmra.mxu0 %v1162
        %v1190 = vpop.f32.mrf.mxu0
        %v1191 = vadd.f32 %v1154, %v1190
        %1192 = vdwg.mxu0
        %1193 = vst [vmem:[%s6] sm:$0xff] %v1182
        %1194 = vst [vmem:[%s6 + $0x8] sm:$0xff] %v1185
        %1195 = vst [vmem:[%s6 + $0x10] sm:$0xff] %v1188
        %1196 = vst [vmem:[%s6 + $0x18] sm:$0xff] %v1191
      $region52: #{lstm_forward.1} parent=43 // pred_fallthru
        _
      // Predicated region
      $region53: #{lstm_forward.1} parent=43 // pred_check
        %p1197 = pneg %p161
      $region54: #{lstm_forward.1} parent=43 // pred_check_branch
        %1199 = sbr.rel (%p1197) target = $region56
      $region55: #{lstm_forward.1} parent=43 // pred_region
        _
      $region56: #{lstm_forward.1} parent=43 // pred_fallthru
        _
      // Predicated region
      $region57: #{lstm_forward.1} parent=43 // pred_check
        %p1200 = pneg %p161
      $region58: #{lstm_forward.1} parent=43 // pred_check_branch
        %1202 = sbr.rel (%p1200) target = $region60
      $region59: #{lstm_forward.1} parent=43 // pred_region
        _
      $region60: #{lstm_forward.1} parent=43 // pred_fallthru
        _
    $region44: #{lstm_forward.1} parent=5 // pred_fallthru
      _
    %p1203 = scmp.le.s32.totalorder 2, %s12
    // Predicated region
    $region61: #{lstm_forward.1} parent=5 // pred_check
      %p1204 = pneg %p1203
    $region62: #{lstm_forward.1} parent=5 // pred_check_branch
      %1206 = sbr.rel (%p1204) target = $region64
    $region63: #{lstm_forward.1} parent=5 // pred_region
      %s1207 = ssub.s32 %s12, 2
    $region64: #{lstm_forward.1} parent=5 // pred_fallthru
      _
  $region6: #{lstm_forward.1} parent=0 // loop_footer
    %s16 = sadd.s32 1, %s12
  $region7: #{lstm_forward.1} parent=0 // loop_footer_branch
    %11 = sbr.rel target = $region3
  $region8: #{lstm_forward.1} parent=0 // loop_exit
    _

</llo_original>
